<compile_context>
chip_gen: v6e
topology: v6e:2x2x1
jax: 0.10.0
libtpu: 0.0.40
codegen_flags: <defaults>
</compile_context>

<pallas_src>
import functools

import jax
import jax.numpy as jnp
from jax import lax
from jax.experimental import pallas as pl
from jax.experimental.pallas import tpu as pltpu


def _round_up(x, m):
    return (x + m - 1) // m * m


def _embed_kernel(patches_ref, w_ref, pos_ref, out_ref, *, precision):
    # patches_ref: (tS, K)  compute dtype; global row 0 is an all-zero
    #              "class token" row (batch dim squeezed).
    # w_ref:       (K, D)   compute dtype, constant index map -> stays resident.
    # pos_ref:     (tS, D)  compute dtype; global row 0 already holds
    #              position_embedding[0] + class_embedding.
    # out_ref:     (tS, D)  output dtype (batch dim squeezed).
    acc = jnp.dot(patches_ref[...], w_ref[...],
                  preferred_element_type=jnp.float32,
                  precision=precision)                       # MXU, f32 accumulate
    out_ref[...] = (acc + pos_ref[...].astype(jnp.float32)).astype(out_ref.dtype)


def clip_vision_embeddings(pixel_values, conv_weight, class_embedding,
                           position_embedding, patch_size, *,
                           compute_dtype=jnp.bfloat16,
                           out_dtype=None,
                           max_seq_tile=1024,
                           precision=None):
    """pixel_values: (B, C, H, W) NCHW
       conv_weight:  (D, C, P, P)  (PyTorch OIHW, stride==kernel, no bias)
       class_embedding: (D,)
       position_embedding: (Np+1, D)
       precision: lax.Precision for the in-kernel dot (pass
                  lax.Precision.HIGHEST for a strict f32 check at large K).
       Returns (B, Np+1, D), identical to the PyTorch module output.
    """
    B, C, H, W = pixel_values.shape
    D = conv_weight.shape[0]
    P = patch_size
    Hp, Wp = H // P, W // P
    Np = Hp * Wp
    K = C * P * P
    S = Np + 1                       # class token + patch tokens
    if out_dtype is None:
        out_dtype = compute_dtype

    # --- patch extraction (wrapper side, one cast->transpose->pad pass) ------
    # TODO(synk): fuse this rearrange into the kernel (grid over (b, hp),
    # pixel BlockSpec (None, C, P, W) + in-kernel (C,P,Wp,P)->(Wp,K) relayout)
    # once that relayout is verified to lower on this JAX build; until then the
    # review's fallback is applied: bf16 cast *before* the transpose and no K
    # zero-pad, so exactly one patch-sized tensor is materialized in HBM.
    x = pixel_values.astype(compute_dtype)
    patches = x.reshape(B, C, Hp, P, Wp, P)
    patches = patches.transpose(0, 2, 4, 1, 3, 5).reshape(B, Np, K)

    # Sequence tiling over the full (cls + patches) sequence so the class row
    # comes out of the kernel and no post-kernel concatenate is needed.
    if S <= max_seq_tile:
        tS, n_seq, S_pad = S, 1, S          # full-dim block -> always legal
    else:
        n_seq = -(-S // max_seq_tile)
        tS = _round_up(-(-S // n_seq), 8)   # >= 256 rows whenever we tile
        S_pad = tS * n_seq

    # One pad op: prepend the zero class-token row (and any trailing seq pad).
    patches = jnp.pad(patches, ((0, 0), (1, S_pad - 1 - Np), (0, 0)))

    # Flattened conv weight (D, C, P, P) -> (K, D) so patches @ w == conv out.
    w_flat = conv_weight.reshape(D, K).T.astype(compute_dtype)

    # Additive rows: position embedding with class_embedding folded into row 0,
    # DMA'd in the compute dtype (upcast in-kernel; accumulation is f32).
    add_rows = position_embedding.astype(jnp.float32)
    add_rows = add_rows.at[0].add(class_embedding.astype(jnp.float32))
    add_rows = add_rows.astype(compute_dtype)
    if S_pad != S:
        add_rows = jnp.pad(add_rows, ((0, S_pad - S), (0, 0)))

    # VMEM budget: double-buffered tiles + weight, clamped below the physical
    # per-core VMEM of this generation (v7x ~52 MiB usable; v5e/v6e ~116 MiB).
    cb = jnp.dtype(compute_dtype).itemsize
    ob = jnp.dtype(out_dtype).itemsize
    est = 2 * (tS * K * cb + K * D * cb + tS * D * cb + tS * D * ob)
    phys = 64 << 20
    try:
        info = pltpu.get_tpu_info()
        phys = int(getattr(info, "vmem_capacity_bytes", phys))
    except Exception:
        pass
    cap = max(phys - (12 << 20), 16 << 20)
    vmem_limit = int(min(max(est + (4 << 20), 32 << 20), cap))

    grid = (n_seq, B)   # seq tiles outermost: megacore has work even at B == 1

    grid_spec = pltpu.PrefetchScalarGridSpec(
        num_scalar_prefetch=0,
        grid=grid,
        in_specs=[
            pl.BlockSpec((None, tS, K), lambda s, b: (b, s, 0)),
            # Constant index map -> fetched once, stays resident across the grid.
            # TODO(synk): pipeline_mode=pl.Buffered(1) here (single buffer for a
            # never-changing block) once verified to lower on this JAX build.
            pl.BlockSpec((K, D), lambda s, b: (0, 0)),
            pl.BlockSpec((tS, D), lambda s, b: (s, 0)),
        ],
        out_specs=pl.BlockSpec((None, tS, D), lambda s, b: (b, s, 0)),
    )

    out = pl.pallas_call(
        functools.partial(_embed_kernel, precision=precision),
        out_shape=jax.ShapeDtypeStruct((B, S_pad, D), out_dtype),
        grid_spec=grid_spec,
        compiler_params=pltpu.CompilerParams(
            dimension_semantics=("parallel", "parallel"),
            vmem_limit_bytes=vmem_limit),
    )(patches, w_flat, add_rows)

    # TODO(synk): optional fp8 patch/weight path with per-tile scales for the
    # v7x MXU (kernel is HBM-bound, so fp8 halves patch DMA bytes again).
    if S_pad != S:
        out = out[:, :S, :]     # only reached when S > max_seq_tile
    return out


def _reference(pixel_values, conv_weight, class_embedding, position_embedding,
               patch_size):
    """Pure-JAX reference mirroring the PyTorch forward (lax conv)."""
    B = pixel_values.shape[0]
    D = conv_weight.shape[0]
    conv = jax.lax.conv_general_dilated(
        pixel_values, conv_weight,
        window_strides=(patch_size, patch_size), padding="VALID",
        dimension_numbers=("NCHW", "OIHW", "NCHW"))          # (B, D, Hp, Wp)
    patch_embeds = conv.reshape(B, D, -1).transpose(0, 2, 1)  # (B, Np, D)
    class_embeds = jnp.broadcast_to(class_embedding, (B, 1, D))
    embeddings = jnp.concatenate([class_embeds, patch_embeds], axis=1)
    return embeddings + position_embedding[None, :, :]


if __name__ == "__main__":
    # Small config consistent with the module.
    batch = 2
    num_channels = 4
    image_size = 16
    patch_size = 4
    hidden_size = 32
    num_patches = (image_size // patch_size) ** 2
    num_positions = num_patches + 1

    key = jax.random.PRNGKey(0)
    k_px, k_w, k_cls, k_pos = jax.random.split(key, 4)

    pixel_values = jax.random.normal(
        k_px, (batch, num_channels, image_size, image_size), dtype=jnp.float32)
    conv_weight = jax.random.normal(
        k_w, (hidden_size, num_channels, patch_size, patch_size),
        dtype=jnp.float32) * 0.02
    class_embedding = jax.random.normal(k_cls, (hidden_size,), dtype=jnp.float32)
    position_embedding = jax.random.normal(
        k_pos, (num_positions, hidden_size), dtype=jnp.float32) * 0.02

    ref = _reference(pixel_values, conv_weight, class_embedding,
                     position_embedding, patch_size)

    # Strict f32 compute path (both sides at default MXU precision, so the
    # matmul / conv input treatment matches): tight tolerance.
    out_f32 = clip_vision_embeddings(
        pixel_values, conv_weight, class_embedding, position_embedding,
        patch_size, compute_dtype=jnp.float32, out_dtype=jnp.float32)
    out_f32 = jax.block_until_ready(out_f32)

    # Default bf16 MXU path (f32 accumulation, bf16 output): looser tolerance.
    out_bf16 = clip_vision_embeddings(
        pixel_values, conv_weight, class_embedding, position_embedding,
        patch_size)
    out_bf16 = jax.block_until_ready(out_bf16)

    assert out_f32.shape == (batch, num_positions, hidden_size), out_f32.shape
    assert out_bf16.shape == (batch, num_positions, hidden_size), out_bf16.shape
    assert out_bf16.dtype == jnp.bfloat16, out_bf16.dtype
    assert jnp.allclose(out_f32, ref, atol=1e-4, rtol=1e-4), \
        float(jnp.max(jnp.abs(out_f32 - ref)))
    assert jnp.allclose(out_bf16.astype(jnp.float32), ref, atol=3e-2, rtol=3e-2), \
        float(jnp.max(jnp.abs(out_bf16.astype(jnp.float32) - ref)))

    print("KERNEL_OK")
</pallas_src>

<mosaic_0001>
module attributes {stable_mosaic.version = 11 : i64} {
  func.func @_embed_kernel(%arg0: i32, %arg1: i32, %arg2: memref<1x17x64xf32, #tpu.memory_space<vmem>>, %arg3: memref<64x32xf32, #tpu.memory_space<vmem>>, %arg4: memref<17x32xf32, #tpu.memory_space<vmem>>, %arg5: memref<1x17x32xf32, #tpu.memory_space<vmem>>) attributes {dimension_semantics = [#tpu.dimension_semantics<parallel>, #tpu.dimension_semantics<parallel>], iteration_bounds = array<i64: 1, 2>, scalar_prefetch = 0 : i64, scratch_operands = 0 : i64, tpu.core_type = #tpu.core_type<tc>, window_params = [{transform_indices = @transform_0, window_bounds = array<i64: 1, 17, 64>}, {pipeline_mode = #tpu.pipeline_mode<synchronous>, transform_indices = @transform_1, window_bounds = array<i64: 64, 32>}, {transform_indices = @transform_2, window_bounds = array<i64: 17, 32>}, {transform_indices = @transform_3, window_bounds = array<i64: 1, 17, 32>}]} {
    %c0 = arith.constant 0 : index
    %c0_0 = arith.constant 0 : index
    %c0_1 = arith.constant 0 : index
    %0 = vector.load %arg2[%c0, %c0_0, %c0_1] : memref<1x17x64xf32, #tpu.memory_space<vmem>>, vector<1x17x64xf32>
    %1 = vector.shape_cast %0 : vector<1x17x64xf32> to vector<17x64xf32>
    %c0_2 = arith.constant 0 : index
    %c0_3 = arith.constant 0 : index
    %2 = vector.load %arg3[%c0_2, %c0_3] : memref<64x32xf32, #tpu.memory_space<vmem>>, vector<64x32xf32>
    %cst = arith.constant dense<0.000000e+00> : vector<17x32xf32>
    %3 = tpu.matmul %1, %2, %cst {dimension_numbers = #tpu.dot_dimension_numbers<[1], [0], [0], [1], [0, 0, 1, 1], [], []>} : vector<17x64xf32>, vector<64x32xf32>, vector<17x32xf32> -> vector<17x32xf32>
    %c0_4 = arith.constant 0 : index
    %c0_5 = arith.constant 0 : index
    %4 = vector.load %arg4[%c0_4, %c0_5] : memref<17x32xf32, #tpu.memory_space<vmem>>, vector<17x32xf32>
    %5 = arith.addf %3, %4 : vector<17x32xf32>
    %c0_6 = arith.constant 0 : index
    %c0_7 = arith.constant 0 : index
    %c0_8 = arith.constant 0 : index
    %6 = vector.load %arg5[%c0_6, %c0_7, %c0_8] : memref<1x17x32xf32, #tpu.memory_space<vmem>>, vector<1x17x32xf32>
    %7 = vector.shape_cast %6 : vector<1x17x32xf32> to vector<17x32xf32>
    %8 = vector.shape_cast %5 : vector<17x32xf32> to vector<1x17x32xf32>
    tpu.vector_store %arg5[%c0_6, %c0_7, %c0_8], %8 {strides = array<i32>} : memref<1x17x32xf32, #tpu.memory_space<vmem>>, vector<1x17x32xf32>,
    return
  }
  func.func @transform_0(%arg0: i32, %arg1: i32) -> (i32, i32, i32) {
    %c0_i32 = arith.constant 0 : i32
    %c0_i32_0 = arith.constant 0 : i32
    return %arg1, %arg0, %c0_i32 : i32, i32, i32
  }
  func.func @transform_1(%arg0: i32, %arg1: i32) -> (i32, i32) {
    %c0_i32 = arith.constant 0 : i32
    %c0_i32_0 = arith.constant 0 : i32
    %c0_i32_1 = arith.constant 0 : i32
    return %c0_i32, %c0_i32_0 : i32, i32
  }
  func.func @transform_2(%arg0: i32, %arg1: i32) -> (i32, i32) {
    %c0_i32 = arith.constant 0 : i32
    %c0_i32_0 = arith.constant 0 : i32
    return %arg0, %c0_i32 : i32, i32
  }
  func.func @transform_3(%arg0: i32, %arg1: i32) -> (i32, i32, i32) {
    %c0_i32 = arith.constant 0 : i32
    %c0_i32_0 = arith.constant 0 : i32
    return %arg1, %arg0, %c0_i32 : i32, i32, i32
  }
}

</mosaic_0001>

<llo_original>
// kernel: tpu_custom_call.1
$region0: #{tpu_custom_call.1}
  #allocation0 [shape = 'u32[]', space=smem, size = 0x4, offset = 0x4, fixed_abs, tag = 'smem constant byte address 0x4 - core index']
  #allocation1 [shape = 'u32[144,128]{1,0:T(1,128)}', space=vmem, size = 0x12000, scoped, tag = 'internal scratch']
  %s0 = inlined_call_operand.vmem [shape: f32[2,17,64], index: 0, kind: input, shape index: {}]
  %s1 = inlined_call_operand.vmem [shape: f32[64,32], index: 1, kind: input, shape index: {}]
  %s2 = inlined_call_operand.vmem [shape: f32[17,32], index: 2, kind: input, shape index: {}]
  %s3 = inlined_call_operand.vmem [shape: f32[2,17,32], index: 3, kind: output, shape index: {}]
  %s4 = sld [smem:[#allocation0]]
  $region45: #{tpu_custom_call.1} parent=0
    _
  %s6 = ssub.s32 1, %s4
  %s7 = scalar_select 0, %s6, %s4
  loop: start=0, step=1, limit=4
  $region2: #{tpu_custom_call.1} parent=0 // loop_pre_header
    _
  $region3: #{tpu_custom_call.1} parent=0 // loop_header
    %s9 = sphi 0, %s13
    %p10 = scmp.ge.s32.totalorder %s9, 4
    %s16 = sphi 0, %s28
    %s17 = sphi 0, %s24
    %s18 = sphi 0, %s16
    %s19 = sphi 0, %s17
    %s20 = sphi 0, %s18
    %s21 = sphi 0, %s19
    %s33 = sphi 0, %s35
    %s36 = sphi 0, %s33
    %s37 = sphi 0, %s36
    %s53 = sphi 0, %s37
    %s57 = sphi 0, %s57
    %s59 = sphi 0, %s57
    %s60 = sphi 0, %s59
    %s74 = sphi 0, %s60
    %s80 = sphi 0, %s82
    %s83 = sphi 0, %s80
    %s84 = sphi 0, %s83
    %s100 = sphi 0, %s84
    %s108 = sphi 0, %s110
    %s111 = sphi 0, %s108
    %s112 = sphi 0, %s111
    %s128 = sphi 0, %s112
  $region4: #{tpu_custom_call.1} parent=0 // loop_header_branch
    %12 = sbr.rel (%p10) target = $region8
  $region5: #{tpu_custom_call.1} parent=0 // loop_body
    %s14 = ssub.s32 %s9, 1
    %s15 = ssub.s32 %s9, 2
    %s22 = sadd.s32 1, %s17
    %p23 = scmp.ge.s32.totalorder %s22, 2
    %s24 = scalar_select %p23, 0, %s22
    %s25 = sadd.s32 1, %s16
    %s26 = scalar_select %p23, %s25, %s16
    %p27 = scmp.ge.s32.totalorder %s26, 1
    %s28 = scalar_select %p27, 0, %s26
    %s29 = ssub.s32 %s17, %s24
    %s30 = ssub.s32 %s16, %s28
    %s31 = sor.u32 %s29, %s30
    %p32 = scmp.eq.s32.totalorder %s31, 0
    %s34 = sadd.s32 %s33, 1
    %s35 = scalar_select %p32, %s33, %s34
    %p38 = pneg %p32
    %p39 = scmp.eq.s32.totalorder %s9, 1
    %p40 = por %p38, %p39
    %p41 = scmp.ne.s32.totalorder %s33, %s36
    %p42 = scmp.eq.s32.totalorder %s9, 0
    %p43 = por %p41, %p42
    %p44 = scmp.ne.s32.totalorder %s33, %s36
    %p45 = scmp.eq.s32.totalorder %s14, 1
    %p46 = por %p44, %p45
    %p47 = scmp.ne.s32.totalorder %s36, %s37
    %p48 = scmp.eq.s32.totalorder %s14, 0
    %p49 = por %p47, %p48
    %p50 = scmp.ne.s32.totalorder %s36, %s37
    %p51 = scmp.eq.s32.totalorder %s15, 1
    %p52 = por %p50, %p51
    %p54 = scmp.ne.s32.totalorder %s37, %s53
    %p55 = scmp.eq.s32.totalorder %s15, 0
    %p56 = por %p54, %p55
    %s58 = sadd.s32 %s57, 1
    %p61 = scmp.eq.s32.totalorder %s9, 1
    %p62 = scmp.ne.s32.totalorder %s57, %s59
    %p63 = scmp.eq.s32.totalorder %s9, 0
    %p64 = por %p62, %p63
    %p65 = scmp.ne.s32.totalorder %s57, %s59
    %p66 = scmp.eq.s32.totalorder %s14, 1
    %p67 = por %p65, %p66
    %p68 = scmp.ne.s32.totalorder %s59, %s60
    %p69 = scmp.eq.s32.totalorder %s14, 0
    %p70 = por %p68, %p69
    %p71 = scmp.ne.s32.totalorder %s59, %s60
    %p72 = scmp.eq.s32.totalorder %s15, 1
    %p73 = por %p71, %p72
    %p75 = scmp.ne.s32.totalorder %s60, %s74
    %p76 = scmp.eq.s32.totalorder %s15, 0
    %p77 = por %p75, %p76
    %s78 = ssub.s32 %s16, %s28
    %p79 = scmp.eq.s32.totalorder %s78, 0
    %s81 = sadd.s32 %s80, 1
    %s82 = scalar_select %p79, %s80, %s81
    %p85 = pneg %p79
    %p86 = scmp.eq.s32.totalorder %s9, 1
    %p87 = por %p85, %p86
    %p88 = scmp.ne.s32.totalorder %s80, %s83
    %p89 = scmp.eq.s32.totalorder %s9, 0
    %p90 = por %p88, %p89
    %p91 = scmp.ne.s32.totalorder %s80, %s83
    %p92 = scmp.eq.s32.totalorder %s14, 1
    %p93 = por %p91, %p92
    %p94 = scmp.ne.s32.totalorder %s83, %s84
    %p95 = scmp.eq.s32.totalorder %s14, 0
    %p96 = por %p94, %p95
    %p97 = scmp.ne.s32.totalorder %s83, %s84
    %p98 = scmp.eq.s32.totalorder %s15, 1
    %p99 = por %p97, %p98
    %p101 = scmp.ne.s32.totalorder %s84, %s100
    %p102 = scmp.eq.s32.totalorder %s15, 0
    %p103 = por %p101, %p102
    %s104 = ssub.s32 %s17, %s24
    %s105 = ssub.s32 %s16, %s28
    %s106 = sor.u32 %s104, %s105
    %p107 = scmp.eq.s32.totalorder %s106, 0
    %s109 = sadd.s32 %s108, 1
    %s110 = scalar_select %p107, %s108, %s109
    %p113 = pneg %p107
    %p114 = scmp.eq.s32.totalorder %s9, 1
    %p115 = por %p113, %p114
    %p116 = scmp.ne.s32.totalorder %s108, %s111
    %p117 = scmp.eq.s32.totalorder %s9, 0
    %p118 = por %p116, %p117
    %p119 = scmp.ne.s32.totalorder %s108, %s111
    %p120 = scmp.eq.s32.totalorder %s14, 1
    %p121 = por %p119, %p120
    %p122 = scmp.ne.s32.totalorder %s111, %s112
    %p123 = scmp.eq.s32.totalorder %s14, 0
    %p124 = por %p122, %p123
    %p125 = scmp.ne.s32.totalorder %s111, %s112
    %p126 = scmp.eq.s32.totalorder %s15, 1
    %p127 = por %p125, %p126
    %p129 = scmp.ne.s32.totalorder %s112, %s128
    %p130 = scmp.eq.s32.totalorder %s15, 0
    %p131 = por %p129, %p130
    %p132 = scmp.le.s32.totalorder 1, %s9
    %p133 = scmp.lt.s32.totalorder %s9, 3
    %p134 = pnand %p132, %p133
    %p135 = pneg %p134
    // Predicated region
    $region9: #{tpu_custom_call.1} parent=5 // pred_check
      _
    $region10: #{tpu_custom_call.1} parent=5 // pred_check_branch
      %137 = sbr.rel (%p134) target = $region12
    $region11: #{tpu_custom_call.1} parent=5 // pred_region
      %s138 = ssub.s32 %s9, 1
      // Predicated region
      $region13: #{tpu_custom_call.1} parent=11 // pred_check
        %p139 = pneg %p70
      $region14: #{tpu_custom_call.1} parent=11 // pred_check_branch
        %141 = sbr.rel (%p139) target = $region16
      $region15: #{tpu_custom_call.1} parent=11 // pred_region
        _
      $region16: #{tpu_custom_call.1} parent=11 // pred_fallthru
        _
      // Predicated region
      $region17: #{tpu_custom_call.1} parent=11 // pred_check
        %p142 = pneg %p96
      $region18: #{tpu_custom_call.1} parent=11 // pred_check_branch
        %144 = sbr.rel (%p142) target = $region20
      $region19: #{tpu_custom_call.1} parent=11 // pred_region
        %s145 = smul.u32 3, %s18
        %p146 = scmp.lt.s32.totalorder %s145, 2
        %s147 = scalar_select %p146, %s145, 2
        %s148 = smul.addr %s147, 8
        %s149 = scalar_lea.vmem %s2, %s148
        %s150 = smul.u32 3, %s18
      $region20: #{tpu_custom_call.1} parent=11 // pred_fallthru
        _
    $region12: #{tpu_custom_call.1} parent=5 // pred_fallthru
      _
    %p151 = scmp.lt.s32.totalorder %s9, 2
    // Predicated region
    $region21: #{tpu_custom_call.1} parent=5 // pred_check
      %p152 = pneg %p151
    $region22: #{tpu_custom_call.1} parent=5 // pred_check_branch
      %154 = sbr.rel (%p152) target = $region24
    $region23: #{tpu_custom_call.1} parent=5 // pred_region
      // Predicated region
      $region25: #{tpu_custom_call.1} parent=23 // pred_check
        %p155 = pneg %p43
      $region26: #{tpu_custom_call.1} parent=23 // pred_check_branch
        %157 = sbr.rel (%p155) target = $region28
      $region27: #{tpu_custom_call.1} parent=23 // pred_region
        %s158 = smul.u32 3, %s16
        %p159 = scmp.lt.s32.totalorder %s17, 1
        %s160 = scalar_select %p159, %s17, 1
        %p161 = scmp.lt.s32.totalorder %s158, 2
        %s162 = scalar_select %p161, %s158, 2
        %s163 = smul.addr %s160, 3
        %s164 = sadd.s32 %s162, %s163
        %s165 = smul.addr %s164, 8
        %s166 = scalar_lea.vmem %s0, %s165
        %s167 = smul.u32 3, %s16
      $region28: #{tpu_custom_call.1} parent=23 // pred_fallthru
        _
    $region24: #{tpu_custom_call.1} parent=5 // pred_fallthru
      _
    %p168 = scmp.le.s32.totalorder 1, %s9
    %p169 = scmp.lt.s32.totalorder %s9, 3
    %p170 = pnand %p168, %p169
    %p171 = pneg %p170
    // Predicated region
    $region29: #{tpu_custom_call.1} parent=5 // pred_check
      _
    $region30: #{tpu_custom_call.1} parent=5 // pred_check_branch
      %173 = sbr.rel (%p170) target = $region32
    $region31: #{tpu_custom_call.1} parent=5 // pred_region
      %s174 = ssub.s32 %s9, 1
      %s175 = smul.u32 3, %s18
      %p176 = scmp.lt.s32.totalorder %s19, 1
      %s177 = scalar_select %p176, %s19, 1
      %p178 = scmp.lt.s32.totalorder %s175, 2
      %s179 = scalar_select %p178, %s175, 2
      %s180 = smul.addr %s177, 3
      %s181 = sadd.s32 %s179, %s180
      %s182 = smul.addr %s181, 8
      %s183 = scalar_lea.vmem %s0, %s182
      %p184 = pneg %p49
      %p185 = pneg %p46
      %p186 = pneg %p70
      %p187 = pneg %p67
      %s188 = smul.u32 3, %s18
      %p189 = scmp.lt.s32.totalorder %s188, 2
      %s190 = scalar_select %p189, %s188, 2
      %s191 = smul.addr %s190, 8
      %s192 = scalar_lea.vmem %s2, %s191
      %p193 = pneg %p96
      %p194 = pneg %p93
      %p195 = pneg %p124
      %p196 = pneg %p121
      %s197 = smul.u32 3, %s18
      %p198 = scmp.lt.s32.totalorder %s19, 1
      %s199 = scalar_select %p198, %s19, 1
      %p200 = scmp.lt.s32.totalorder %s197, 2
      %s201 = scalar_select %p200, %s197, 2
      %s202 = smul.addr %s199, 3
      %s203 = sadd.s32 %s201, %s202
      %s204 = smul.addr %s203, 8
      %s205 = scalar_lea.vmem %s3, %s204
      %s206 = smul.u32 3, %s18
      %p207 = scmp.lt.s32.totalorder %s19, 1
      %s208 = scalar_select %p207, %s19, 1
      %p209 = scmp.lt.s32.totalorder %s206, 2
      %s210 = scalar_select %p209, %s206, 2
      %s211 = smul.addr %s208, 3
      %s212 = sadd.s32 %s210, %s211
      %s213 = smul.addr %s212, 8
      %s214 = scalar_lea.vmem %s0, %s213
      %s215 = smul.u32 3, %s18
      %s216 = smul.u32 3, %s18
      %p217 = scmp.lt.s32.totalorder %s216, 2
      %s218 = scalar_select %p217, %s216, 2
      %s219 = smul.addr %s218, 8
      %s220 = scalar_lea.vmem %s2, %s219
      %s221 = smul.u32 3, %s18
      %s222 = smul.u32 3, %s18
      %p223 = scmp.lt.s32.totalorder %s19, 1
      %s224 = scalar_select %p223, %s19, 1
      %p225 = scmp.lt.s32.totalorder %s222, 2
      %s226 = scalar_select %p225, %s222, 2
      %s227 = smul.addr %s224, 3
      %s228 = sadd.s32 %s226, %s227
      %s229 = smul.addr %s228, 8
      %s230 = scalar_lea.vmem %s3, %s229
      %s231 = smul.u32 3, %s18
      %v232 = vld [vmem:[%s214] sm:$0xff]
      %v233 = vld [vmem:[%s214 + $0x8] sm:$0xff]
      %v234 = vld [vmem:[%s214 + $0x10] sm:$0x1]
      %v235 = vld [vmem:[%s1] sm:$0xff]
      %v236 = vld [vmem:[%s1 + $0x8] sm:$0xff]
      %v237 = vld [vmem:[%s1 + $0x10] sm:$0xff]
      %v238 = vld [vmem:[%s1 + $0x18] sm:$0xff]
      %v239 = vld [vmem:[%s1 + $0x20] sm:$0xff]
      %v240 = vld [vmem:[%s1 + $0x28] sm:$0xff]
      %v241 = vld [vmem:[%s1 + $0x30] sm:$0xff]
      %v242 = vld [vmem:[%s1 + $0x38] sm:$0xff]
      %v243 = vld [vmem:[%s220] sm:$0xff]
      %v244 = vld [vmem:[%s220 + $0x8] sm:$0xff]
      %v245 = vld [vmem:[%s220 + $0x10] sm:$0x1]
      %vm246 = vcmask 523264
      %v248 = vsel %vm246, %v232, 0
      %v251 = vsel %vm246, %v233, 0
      %v254 = vsel %vm246, %v234, 0
      %256 = vmatprep.subr.mxu0 0.0
      %257 = vmatpush1.msra.mxu0 0.0
      %258 = vmatprep.subr.mxu0 0.0
      %259 = vmatpush1.msra.mxu0 0.0
      %260 = vmatprep.subr.mxu0 0.0
      %261 = vmatpush1.msra.mxu0 0.0
      %262 = vmatprep.subr.mxu0 0.0
      %263 = vmatpush1.msra.mxu0 0.0
      %264 = vmatprep.subr.mxu0 0.0
      %265 = vmatpush1.msra.mxu0 0.0
      %266 = vmatprep.subr.mxu0 0.0
      %267 = vmatpush1.msra.mxu0 0.0
      %268 = vmatprep.subr.mxu0 0.0
      %269 = vmatpush1.msra.mxu0 0.0
      %270 = vmatprep.subr.mxu0 0.0
      %271 = vmatpush1.msra.mxu0 0.0
      %272 = vmatprep.subr.mxu0 0.0
      %273 = vmatpush1.msra.mxu0 %v242
      %274 = vmatprep.subr.mxu0 0.0
      %275 = vmatpush1.msra.mxu0 %v241
      %276 = vmatprep.subr.mxu0 0.0
      %277 = vmatpush1.msra.mxu0 %v240
      %278 = vmatprep.subr.mxu0 0.0
      %279 = vmatpush1.msra.mxu0 %v239
      %280 = vmatprep.subr.mxu0 0.0
      %281 = vmatpush1.msra.mxu0 %v238
      %282 = vmatprep.subr.mxu0 0.0
      %283 = vmatpush1.msra.mxu0 %v237
      %284 = vmatprep.subr.mxu0 0.0
      %285 = vmatpush1.msra.mxu0 %v236
      %286 = vmatprep.subr.mxu0 0.0
      %287 = vmatpush1.msra.mxu0 %v235
      %288 = vmatprep.subr.mxu0 0.0
      %289 = vmatpush2.msra.mxu0 0.0
      %290 = vmatprep.subr.mxu0 0.0
      %291 = vmatpush2.msra.mxu0 0.0
      %292 = vmatprep.subr.mxu0 0.0
      %293 = vmatpush2.msra.mxu0 0.0
      %294 = vmatprep.subr.mxu0 0.0
      %295 = vmatpush2.msra.mxu0 0.0
      %296 = vmatprep.subr.mxu0 0.0
      %297 = vmatpush2.msra.mxu0 0.0
      %298 = vmatprep.subr.mxu0 0.0
      %299 = vmatpush2.msra.mxu0 0.0
      %300 = vmatprep.subr.mxu0 0.0
      %301 = vmatpush2.msra.mxu0 0.0
      %302 = vmatprep.subr.mxu0 0.0
      %303 = vmatpush2.msra.mxu0 0.0
      %304 = vmatprep.subr.mxu0 0.0
      %305 = vmatpush2.msra.mxu0 0.0
      %306 = vmatprep.subr.mxu0 0.0
      %307 = vmatpush2.msra.mxu0 0.0
      %308 = vmatprep.subr.mxu0 0.0
      %309 = vmatpush2.msra.mxu0 0.0
      %310 = vmatprep.subr.mxu0 0.0
      %311 = vmatpush2.msra.mxu0 0.0
      %312 = vmatprep.subr.mxu0 0.0
      %313 = vmatpush2.msra.mxu0 0.0
      %314 = vmatprep.subr.mxu0 0.0
      %315 = vmatpush2.msra.mxu0 0.0
      %316 = vmatprep.subr.mxu0 0.0
      %317 = vmatpush2.msra.mxu0 0.0
      %318 = vmatprep.subr.mxu0 0.0
      %319 = vmatpush2.msra.mxu0 0.0
      %320 = vmatprep.mubr.f32.mxu0 0.0
      %321 = vmatmul.mubr.f32.gmra.mxu0 %v248
      %v322 = vpop.f32.mrf.mxu0
      %v323 = vadd.f32 %v243, %v322
      %v324 = vpop.f32.mrf.mxu0
      %325 = vmatprep.mubr.f32.mxu0 0.0
      %326 = vmatmul.mubr.f32.gmra.mxu0 %v251
      %v327 = vpop.f32.mrf.mxu0
      %v328 = vadd.f32 %v244, %v327
      %v329 = vpop.f32.mrf.mxu0
      %330 = vmatprep.mubr.f32.mxu0 0.0
      %331 = vmatmul.mubr.f32.gmra.mxu0 %v254
      %v332 = vpop.f32.mrf.mxu0
      %v333 = vadd.f32 %v245, %v332
      %v334 = vpop.f32.mrf.mxu0
      %335 = vdwg.mxu0
      %vm336 = vcmask 261120
      %337 = vst.msk [vmem:[%s230] sm:$0xff] %vm336, %v323
      %338 = vst.msk [vmem:[%s230 + $0x8] sm:$0xff] %vm336, %v328
      %vm339 = vcmask 253952
      %340 = vst.msk [vmem:[%s230 + $0x10] sm:$0x1] %vm339, %v333
      %s341 = smul.u32 3, %s18
      %p342 = scmp.lt.s32.totalorder %s19, 1
      %s343 = scalar_select %p342, %s19, 1
      %p344 = scmp.lt.s32.totalorder %s341, 2
      %s345 = scalar_select %p344, %s341, 2
      %s346 = smul.addr %s343, 3
      %s347 = sadd.s32 %s345, %s346
      %s348 = smul.addr %s347, 8
      %s349 = scalar_lea.vmem %s3, %s348
      // Predicated region
      $region33: #{tpu_custom_call.1} parent=31 // pred_check
        %p350 = pneg %p121
      $region34: #{tpu_custom_call.1} parent=31 // pred_check_branch
        %352 = sbr.rel (%p350) target = $region36
      $region35: #{tpu_custom_call.1} parent=31 // pred_region
        %s353 = smul.u32 3, %s18
      $region36: #{tpu_custom_call.1} parent=31 // pred_fallthru
        _
    $region32: #{tpu_custom_call.1} parent=5 // pred_fallthru
      _
    %p354 = scmp.le.s32.totalorder 2, %s9
    // Predicated region
    $region37: #{tpu_custom_call.1} parent=5 // pred_check
      %p355 = pneg %p354
    $region38: #{tpu_custom_call.1} parent=5 // pred_check_branch
      %357 = sbr.rel (%p355) target = $region40
    $region39: #{tpu_custom_call.1} parent=5 // pred_region
      %s358 = ssub.s32 %s9, 2
      // Predicated region
      $region41: #{tpu_custom_call.1} parent=39 // pred_check
        %p359 = pneg %p127
      $region42: #{tpu_custom_call.1} parent=39 // pred_check_branch
        %361 = sbr.rel (%p359) target = $region44
      $region43: #{tpu_custom_call.1} parent=39 // pred_region
        %s362 = smul.u32 3, %s20
        %p363 = scmp.lt.s32.totalorder %s21, 1
        %s364 = scalar_select %p363, %s21, 1
        %p365 = scmp.lt.s32.totalorder %s362, 2
        %s366 = scalar_select %p365, %s362, 2
        %s367 = smul.addr %s364, 3
        %s368 = sadd.s32 %s366, %s367
        %s369 = smul.addr %s368, 8
        %s370 = scalar_lea.vmem %s3, %s369
      $region44: #{tpu_custom_call.1} parent=39 // pred_fallthru
        _
    $region40: #{tpu_custom_call.1} parent=5 // pred_fallthru
      _
  $region6: #{tpu_custom_call.1} parent=0 // loop_footer
    %s13 = sadd.s32 1, %s9
  $region7: #{tpu_custom_call.1} parent=0 // loop_footer_branch
    %8 = sbr.rel target = $region3
  $region8: #{tpu_custom_call.1} parent=0 // loop_exit
    _

</llo_original>
